<compile_context>
chip_gen: v6e
topology: v6e:2x2x1
jax: 0.10.0
libtpu: 0.0.40
codegen_flags: <defaults>
</compile_context>

<pallas_src>
import functools

import jax
import jax.numpy as jnp
from jax.experimental import pallas as pl
from jax.experimental.pallas import tpu as pltpu

LANE = 128            # vreg lane width
ACC_SUBLANES = 8      # f32 vreg sublane height
CHUNK_ROWS = 256      # compute chunk: (256,128) f32 = 128 KiB per operand
MAX_TILE_ROWS = 2048  # DMA block:     (2048,128) f32 = 1 MiB per input


@functools.lru_cache(maxsize=None)
def _num_tensorcores() -> int:
    """Best-effort TensorCores-per-chip (2 on v7x, 1 on v5e/v6e); safe fallback 1."""
    try:
        info = pltpu.get_tpu_info()
        for name in ("num_cores", "core_count", "cores_per_chip", "tensorcores_per_chip"):
            v = getattr(info, name, None)
            if isinstance(v, int) and v >= 1:
                return min(int(v), 2)
    except Exception:
        pass
    try:
        v = getattr(jax.devices()[0], "num_cores", None)
        if isinstance(v, int) and v >= 1:
            return min(int(v), 2)
    except Exception:
        pass
    return 1


def _mse_with_logits_kernel(logits_ref, targets_ref, out_ref, *,
                            tile_rows, blocks_per_shard, total, need_mask):
    # logits_ref/targets_ref: (tile_rows, LANE) block of the flattened input.
    # out_ref: (ACC_SUBLANES, LANE) resident accumulator (same block for every
    # step of the trailing "arbitrary" axis; one block per "parallel" shard).
    j = pl.program_id(1)

    @pl.when(j == 0)
    def _():
        out_ref[...] = jnp.zeros_like(out_ref)

    blk = pl.program_id(0) * blocks_per_shard + j   # logical block id (may overflow)

    def accumulate(r0, nrows):
        """Fold loss of rows [r0, r0+nrows) into the (8,128) accumulator."""
        x = logits_ref[r0:r0 + nrows, :].astype(jnp.float32)
        t = targets_ref[r0:r0 + nrows, :].astype(jnp.float32)

        # clamp(sigmoid(x), 1e-4, 1 - 1e-4): EUP transcendental, hidden under DMA.
        p = jnp.clip(jax.nn.sigmoid(x), 0.0001, 1.0 - 0.0001)

        # Fused mask math: weight in {5, 1, 0}; err = p - 1 for positives, p otherwise.
        is_pos = t == 1.0
        weight = jnp.where(is_pos, 5.0, jnp.where(t == 0.0, 1.0, 0.0))
        err = p - jnp.where(is_pos, 1.0, 0.0)
        loss = weight * err * err                                  # (nrows, LANE)

        if need_mask:
            # Zero out padded / out-of-bounds tail elements (garbage-safe: the
            # select drops NaN/Inf produced from undefined partial-block data).
            base = (blk * tile_rows + r0) * LANE
            row = jax.lax.broadcasted_iota(jnp.int32, (nrows, LANE), 0)
            col = jax.lax.broadcasted_iota(jnp.int32, (nrows, LANE), 1)
            loss = jnp.where(base + row * LANE + col < total, loss, 0.0)

        # Fold into one (8, LANE) vreg: pure VPU adds, no XLU reduce.
        fold = (nrows // ACC_SUBLANES) * ACC_SUBLANES
        if fold:
            out_ref[...] += loss[:fold].reshape(-1, ACC_SUBLANES, LANE).sum(axis=0)
        rem = nrows - fold
        if rem:
            out_ref[0:rem, :] += loss[fold:, :]

    # Chunked compute keeps elementwise intermediates at ~128 KiB even though the
    # DMA block is 1 MiB (bounds VMEM scratch / store pressure, esp. on v5e).
    n_chunks = tile_rows // CHUNK_ROWS
    tail = tile_rows - n_chunks * CHUNK_ROWS
    for c in range(n_chunks):
        accumulate(c * CHUNK_ROWS, CHUNK_ROWS)
    if tail:
        accumulate(n_chunks * CHUNK_ROWS, tail)


@functools.partial(jax.jit, static_argnames=("reduction",))
def mse_with_logits_loss(logits, targets, reduction="mean"):
    """Pallas TPU implementation of MSEWithLogitsLoss.forward (reduction='mean')."""
    assert logits.shape == targets.shape
    assert reduction == "mean"  # TODO(synk): reduction='none' path not exercised by loss()

    batch_size = logits.shape[0]
    total = logits.size

    # Read targets at their producer dtype (bf16/int8 cut HBM bytes); only bool is
    # cast (Mosaic i1 vector loads are awkward).  The f32 upcast happens in-kernel.
    if targets.dtype == jnp.bool_:
        targets = targets.astype(jnp.float32)

    # Free reshapes of contiguous data -> no HBM copies.
    flat_logits = logits.reshape(-1)
    flat_targets = targets.reshape(-1)

    # Only a non-multiple-of-128 element count forces a (small) pad copy.
    # TODO(synk): a natural-(B, N)-layout path could avoid even this copy.
    if total % LANE != 0:
        pad = LANE - total % LANE
        flat_logits = jnp.pad(flat_logits, (0, pad))
        flat_targets = jnp.pad(flat_targets, (0, pad))
    rows = flat_logits.size // LANE

    logits2d = flat_logits.reshape(rows, LANE)
    targets2d = flat_targets.reshape(rows, LANE)

    # DMA block: full-extent rows if small, else a (8-multiple) 2048-row block.
    tile_rows = rows if rows <= MAX_TILE_ROWS else MAX_TILE_ROWS
    nblocks = pl.cdiv(rows, tile_rows)

    # 2-way shard only on dual-TensorCore chips (v7x); 1 elsewhere.
    num_shards = max(1, min(_num_tensorcores(), nblocks))
    blocks_per_shard = pl.cdiv(nblocks, num_shards)
    even_split = (num_shards * blocks_per_shard == nblocks)

    # In-kernel tail masking is only emitted when something is actually ragged.
    need_mask = (total != rows * LANE) or (rows % tile_rows != 0) or (not even_split)

    if even_split:
        def in_map(i, j, _bps=blocks_per_shard):
            return (i * _bps + j, 0)
    else:
        def in_map(i, j, _bps=blocks_per_shard, _nb=nblocks):
            # Overflow steps of the last shard re-read the last real block; their
            # contribution is zeroed by the in-kernel tail mask.
            return (jnp.minimum(i * _bps + j, _nb - 1), 0)

    kernel = functools.partial(
        _mse_with_logits_kernel,
        tile_rows=tile_rows,
        blocks_per_shard=blocks_per_shard,
        total=total,
        need_mask=need_mask,
    )

    partials = pl.pallas_call(
        kernel,
        out_shape=jax.ShapeDtypeStruct((num_shards, ACC_SUBLANES, LANE), jnp.float32),
        grid_spec=pltpu.PrefetchScalarGridSpec(
            num_scalar_prefetch=0,
            grid=(num_shards, blocks_per_shard),
            in_specs=[
                pl.BlockSpec((tile_rows, LANE), in_map),
                pl.BlockSpec((tile_rows, LANE), in_map),
            ],
            out_specs=pl.BlockSpec((None, ACC_SUBLANES, LANE), lambda i, j: (i, 0, 0)),
        ),
        compiler_params=pltpu.CompilerParams(
            dimension_semantics=("parallel", "arbitrary"),
        ),
    )(logits2d, targets2d)

    # Single cross-lane reduce + /batch_size outside the kernel (tiny, XLA-fused).
    return jnp.sum(partials) / batch_size


def _reference(logits, targets):
    inputs = jnp.clip(jax.nn.sigmoid(logits.astype(jnp.float32)), 0.0001, 1.0 - 0.0001)
    t = targets.astype(jnp.float32)
    pos_id = (t == 1.0).astype(jnp.float32)
    neg_id = (t == 0.0).astype(jnp.float32)
    loss = 5.0 * pos_id * (inputs - t) ** 2 + 1.0 * neg_id * inputs ** 2
    return jnp.sum(loss) / logits.shape[0]


if __name__ == "__main__":
    key = jax.random.PRNGKey(0)

    def make(shape, k):
        k1, k2, k3 = jax.random.split(k, 3)
        lg = jax.random.normal(k1, shape, dtype=jnp.float32)
        # targets in {0, 1} plus a few "ignore" (0.5) values to exercise both masks.
        tg = jax.random.bernoulli(k2, p=0.3, shape=shape).astype(jnp.float32)
        ig = jax.random.bernoulli(k3, p=0.1, shape=shape)
        return lg, jnp.where(ig, 0.5, tg)

    k0, k1, k2 = jax.random.split(key, 3)

    # Primary case: pred_conf[:, :, 0] for a 16x16 feature map, batch 2.
    B, H, W = 2, 16, 16
    logits, targets = make((B, H * W), k0)
    out = jax.block_until_ready(mse_with_logits_loss(logits, targets))
    ref = _reference(logits, targets)
    assert jnp.allclose(out, ref, rtol=1e-5, atol=1e-5), (out, ref)

    # Larger case: exercises multi-block grid + chunked accumulation path.
    logits, targets = make((2, 256 * 1024), k1)
    out = jax.block_until_ready(mse_with_logits_loss(logits, targets))
    ref = _reference(logits, targets)
    assert jnp.allclose(out, ref, rtol=1e-4, atol=1e-3), (out, ref)

    # Ragged case: element count not a multiple of 128 -> in-kernel tail masking.
    logits, targets = make((3, 100), k2)
    out = jax.block_until_ready(mse_with_logits_loss(logits, targets))
    ref = _reference(logits, targets)
    assert jnp.allclose(out, ref, rtol=1e-5, atol=1e-5), (out, ref)

    print("KERNEL_OK")
</pallas_src>

<mosaic_0001>
module attributes {stable_mosaic.version = 11 : i64} {
  func.func @_mse_with_logits_kernel(%arg0: i32, %arg1: i32, %arg2: memref<4x128xf32, #tpu.memory_space<vmem>>, %arg3: memref<4x128xf32, #tpu.memory_space<vmem>>, %arg4: memref<1x8x128xf32, #tpu.memory_space<vmem>>) attributes {dimension_semantics = [#tpu.dimension_semantics<parallel>, #tpu.dimension_semantics<arbitrary>], iteration_bounds = array<i64: 1, 1>, scalar_prefetch = 0 : i64, scratch_operands = 0 : i64, tpu.core_type = #tpu.core_type<tc>, window_params = [{transform_indices = @transform_0, window_bounds = array<i64: 4, 128>}, {transform_indices = @transform_1, window_bounds = array<i64: 4, 128>}, {transform_indices = @transform_2, window_bounds = array<i64: 1, 8, 128>}]} {
    %c0_i32 = arith.constant 0 : i32
    %0 = arith.cmpi eq, %arg1, %c0_i32 : i32
    %1 = arith.extui %0 : i1 to i32
    %c0_i32_0 = arith.constant 0 : i32
    %2 = arith.cmpi ne, %1, %c0_i32_0 : i32
    scf.if %2 {
      %cst_19 = arith.constant 0.000000e+00 : f32
      %35 = vector.broadcast %cst_19 : f32 to vector<8x128xf32>
      %c0_20 = arith.constant 0 : index
      %c0_21 = arith.constant 0 : index
      %c0_22 = arith.constant 0 : index
      %36 = vector.load %arg4[%c0_20, %c0_21, %c0_22] : memref<1x8x128xf32, #tpu.memory_space<vmem>>, vector<1x8x128xf32>
      %37 = vector.shape_cast %36 : vector<1x8x128xf32> to vector<8x128xf32>
      %38 = vector.shape_cast %35 : vector<8x128xf32> to vector<1x8x128xf32>
      tpu.vector_store %arg4[%c0_20, %c0_21, %c0_22], %38 {strides = array<i32>} : memref<1x8x128xf32, #tpu.memory_space<vmem>>, vector<1x8x128xf32>,
    } else {
    }
    %c0 = arith.constant 0 : index
    %c0_1 = arith.constant 0 : index
    %3 = vector.load %arg2[%c0, %c0_1] : memref<4x128xf32, #tpu.memory_space<vmem>>, vector<4x128xf32>
    %c0_2 = arith.constant 0 : index
    %c0_3 = arith.constant 0 : index
    %4 = vector.load %arg3[%c0_2, %c0_3] : memref<4x128xf32, #tpu.memory_space<vmem>>, vector<4x128xf32>
    %5 = arith.negf %3 : vector<4x128xf32>
    %6 = math.exp %5 : vector<4x128xf32>
    %cst = arith.constant 1.000000e+00 : f32
    %7 = vector.broadcast %cst : f32 to vector<4x128xf32>
    %8 = arith.addf %7, %6 : vector<4x128xf32>
    %9 = arith.divf %7, %8 : vector<4x128xf32>
    %cst_4 = arith.constant 9.99999974E-5 : f32
    %cst_5 = arith.constant 0.999899983 : f32
    %10 = vector.broadcast %cst_4 : f32 to vector<4x128xf32>
    %11 = arith.maximumf %10, %9 : vector<4x128xf32>
    %12 = vector.broadcast %cst_5 : f32 to vector<4x128xf32>
    %13 = arith.minimumf %12, %11 : vector<4x128xf32>
    %cst_6 = arith.constant 1.000000e+00 : f32
    %14 = vector.broadcast %cst_6 : f32 to vector<4x128xf32>
    %15 = arith.cmpf oeq, %4, %14 : vector<4x128xf32>
    %cst_7 = arith.constant 0.000000e+00 : f32
    %16 = vector.broadcast %cst_7 : f32 to vector<4x128xf32>
    %17 = arith.cmpf oeq, %4, %16 : vector<4x128xf32>
    %cst_8 = arith.constant 1.000000e+00 : f32
    %cst_9 = arith.constant 0.000000e+00 : f32
    %18 = vector.broadcast %cst_8 : f32 to vector<4x128xf32>
    %19 = vector.broadcast %cst_9 : f32 to vector<4x128xf32>
    %20 = arith.select %17, %18, %19 : vector<4x128xi1>, vector<4x128xf32>
    %cst_10 = arith.constant 5.000000e+00 : f32
    %21 = vector.broadcast %cst_10 : f32 to vector<4x128xf32>
    %22 = arith.select %15, %21, %20 : vector<4x128xi1>, vector<4x128xf32>
    %cst_11 = arith.constant 1.000000e+00 : f32
    %cst_12 = arith.constant 0.000000e+00 : f32
    %23 = vector.broadcast %cst_11 : f32 to vector<4x128xf32>
    %24 = vector.broadcast %cst_12 : f32 to vector<4x128xf32>
    %25 = arith.select %15, %23, %24 : vector<4x128xi1>, vector<4x128xf32>
    %26 = arith.subf %13, %25 : vector<4x128xf32>
    %27 = arith.mulf %22, %26 : vector<4x128xf32>
    %28 = arith.mulf %27, %26 : vector<4x128xf32>
    %c0_13 = arith.constant 0 : index
    %c0_14 = arith.constant 0 : index
    %c0_15 = arith.constant 0 : index
    %29 = vector.load %arg4[%c0_13, %c0_14, %c0_15] : memref<1x8x128xf32, #tpu.memory_space<vmem>>, vector<1x4x128xf32>
    %30 = vector.shape_cast %29 : vector<1x4x128xf32> to vector<4x128xf32>
    %31 = arith.addf %30, %28 : vector<4x128xf32>
    %c0_16 = arith.constant 0 : index
    %c0_17 = arith.constant 0 : index
    %c0_18 = arith.constant 0 : index
    %32 = vector.load %arg4[%c0_16, %c0_17, %c0_18] : memref<1x8x128xf32, #tpu.memory_space<vmem>>, vector<1x4x128xf32>
    %33 = vector.shape_cast %32 : vector<1x4x128xf32> to vector<4x128xf32>
    %34 = vector.shape_cast %31 : vector<4x128xf32> to vector<1x4x128xf32>
    tpu.vector_store %arg4[%c0_16, %c0_17, %c0_18], %34 {strides = array<i32>} : memref<1x8x128xf32, #tpu.memory_space<vmem>>, vector<1x4x128xf32>,
    return
  }
  func.func @transform_0(%arg0: i32, %arg1: i32) -> (i32, i32) {
    %c1_i32 = arith.constant 1 : i32
    %0 = arith.muli %arg0, %c1_i32 : i32
    %1 = arith.addi %0, %arg1 : i32
    %c0_i32 = arith.constant 0 : i32
    %c0_i32_0 = arith.constant 0 : i32
    return %1, %c0_i32 : i32, i32
  }
  func.func @transform_1(%arg0: i32, %arg1: i32) -> (i32, i32) {
    %c1_i32 = arith.constant 1 : i32
    %0 = arith.muli %arg0, %c1_i32 : i32
    %1 = arith.addi %0, %arg1 : i32
    %c0_i32 = arith.constant 0 : i32
    %c0_i32_0 = arith.constant 0 : i32
    return %1, %c0_i32 : i32, i32
  }
  func.func @transform_2(%arg0: i32, %arg1: i32) -> (i32, i32, i32) {
    %c0_i32 = arith.constant 0 : i32
    %c0_i32_0 = arith.constant 0 : i32
    %c0_i32_1 = arith.constant 0 : i32
    return %arg0, %c0_i32, %c0_i32_0 : i32, i32, i32
  }
}

</mosaic_0001>

<llo_original>
// kernel: mse_with_logits_loss.1
$region0: #{mse_with_logits_loss.1}
  #allocation0 [shape = 'u32[]', space=smem, size = 0x4, offset = 0x4, fixed_abs, tag = 'smem constant byte address 0x4 - core index']
  #allocation1 [shape = 'u32[144,128]{1,0:T(1,128)}', space=vmem, size = 0x12000, scoped, tag = 'internal scratch']
  %s0 = inlined_call_operand.vmem [shape: f32[4,128], index: 0, kind: input, shape index: {}]
  %s1 = inlined_call_operand.vmem [shape: f32[4,128], index: 1, kind: input, shape index: {}]
  %s2 = inlined_call_operand.vmem [shape: f32[1,8,128], index: 2, kind: output, shape index: {}]
  %s3 = sld [smem:[#allocation0]]
  $region22: #{mse_with_logits_loss.1} parent=0
    _
  %s5 = ssub.s32 1, %s3
  %s6 = scalar_select 0, %s5, %s3
  // Predicated region
  $region2: #{mse_with_logits_loss.1} parent=0 // pred_check
    _
  $region3: #{mse_with_logits_loss.1} parent=0 // pred_check_branch
    %8 = sbr.rel (0) target = $region5
  $region4: #{mse_with_logits_loss.1} parent=0 // pred_region
    %s9 = sadd.s32 0, 0
    %p10 = scmp.lt.s32.totalorder %s9, 0
    %s11 = scalar_select %p10, %s9, 0
    %s12 = smul.addr %s11, 4
    %s13 = scalar_lea.vmem %s0, %s12
    %s14 = sadd.s32 0, 0
  $region5: #{mse_with_logits_loss.1} parent=0 // pred_fallthru
    _
  // Predicated region
  $region6: #{mse_with_logits_loss.1} parent=0 // pred_check
    _
  $region7: #{mse_with_logits_loss.1} parent=0 // pred_check_branch
    %16 = sbr.rel (0) target = $region9
  $region8: #{mse_with_logits_loss.1} parent=0 // pred_region
    %s17 = sadd.s32 0, 0
    %p18 = scmp.lt.s32.totalorder %s17, 0
    %s19 = scalar_select %p18, %s17, 0
    %s20 = smul.addr %s19, 4
    %s21 = scalar_lea.vmem %s1, %s20
    %s22 = sadd.s32 0, 0
  $region9: #{mse_with_logits_loss.1} parent=0 // pred_fallthru
    _
  %s23 = sadd.s32 0, 0
  %p24 = scmp.lt.s32.totalorder %s23, 0
  %s25 = scalar_select %p24, %s23, 0
  %s26 = smul.addr %s25, 4
  %s27 = scalar_lea.vmem %s0, %s26
  %s28 = sadd.s32 0, 0
  %p29 = scmp.lt.s32.totalorder %s28, 0
  %s30 = scalar_select %p29, %s28, 0
  %s31 = smul.addr %s30, 4
  %s32 = scalar_lea.vmem %s1, %s31
  %s33 = sadd.s32 0, 0
  %p34 = scmp.lt.s32.totalorder %s33, 0
  %s35 = scalar_select %p34, %s33, 0
  %s36 = smul.addr %s35, 4
  %s37 = scalar_lea.vmem %s0, %s36
  %s38 = sadd.s32 0, 0
  %s39 = sadd.s32 0, 0
  %p40 = scmp.lt.s32.totalorder %s39, 0
  %s41 = scalar_select %p40, %s39, 0
  %s42 = smul.addr %s41, 4
  %s43 = scalar_lea.vmem %s1, %s42
  %s44 = sadd.s32 0, 0
  %p45 = scmp.eq.s32.totalorder 0, 0
  // Predicated region
  $region10: #{mse_with_logits_loss.1} parent=0 // pred_check
    %p46 = pneg %p45
  $region11: #{mse_with_logits_loss.1} parent=0 // pred_check_branch
    %48 = sbr.rel (%p46) target = $region13
  $region12: #{mse_with_logits_loss.1} parent=0 // pred_region
    %49 = vst [vmem:[%s2] sm:$0xff] 0.0
  $region13: #{mse_with_logits_loss.1} parent=0 // pred_fallthru
    _
  %v50 = vld [vmem:[%s37] sm:$0xf]
  %v51 = vld [vmem:[%s43] sm:$0xf]
  %v52 = vxor.u32 %v50, 2147483648
  %v53 = vmul.f32 %v52, 1.442695
  %v54 = vpow.pop %v53
  %v55 = vadd.f32 %v54, 1.0
  %v56 = vrcp.pop %v55
  %v57 = vmul.f32 1.0, %v56
  %v58 = vmax.f32 %v57, 0.0001
  %v59 = vmin.f32 %v58, 0.9999
  %vm60 = vcmp.eq.f32.partialorder %v51, 1.0
  %vm61 = vcmp.eq.f32.partialorder %v51, 0.0
  %v62 = vsel %vm61, 1.0, 0.0
  %v63 = vsel %vm60, 5.0, %v62
  %v64 = vsel %vm60, 1.0, 0.0
  %v65 = vsub.f32 %v59, %v64
  %v66 = vmul.f32 %v63, %v65
  %v67 = vmul.f32 %v66, %v65
  %v68 = vld [vmem:[%s2] sm:$0xf]
  %v69 = vadd.f32 %v68, %v67
  %70 = vst [vmem:[%s2] sm:$0xf] %v69
  // Predicated region
  $region14: #{mse_with_logits_loss.1} parent=0 // pred_check
    _
  $region15: #{mse_with_logits_loss.1} parent=0 // pred_check_branch
    %72 = sbr.rel (0) target = $region17
  $region16: #{mse_with_logits_loss.1} parent=0 // pred_region
    _
  $region17: #{mse_with_logits_loss.1} parent=0 // pred_fallthru
    _
  // Predicated region
  $region18: #{mse_with_logits_loss.1} parent=0 // pred_check
    _
  $region19: #{mse_with_logits_loss.1} parent=0 // pred_check_branch
    %74 = sbr.rel (0) target = $region21
  $region20: #{mse_with_logits_loss.1} parent=0 // pred_region
    _
  $region21: #{mse_with_logits_loss.1} parent=0 // pred_fallthru
    _

</llo_original>
